<compile_context>
chip_gen: v7x
topology: tpu7x:2x2x1
jax: 0.10.0
libtpu: 0.0.40
codegen_flags: <defaults>
</compile_context>

<pallas_src>
import functools

import jax
import jax.numpy as jnp
from jax.experimental import pallas as pl
from jax.experimental.pallas import tpu as pltpu

PAD = 128  # TPU lane width; every kernel-side 2-D operand uses 128 lanes.


def _align8(x):
    return ((x + 7) // 8) * 8


# --------------------------------------------------------------------------
# Parameters (synthetic stand-ins for the pretrained encoders)
# --------------------------------------------------------------------------
def init_params(key, *, vocab=32, d_tok=32, text_dim=32, img_c=4,
                img_dim=64, fusion_out=32):
    """Deterministic synthetic parameters (no checkpoint load)."""
    ks = jax.random.split(key, 8)
    s = 0.05
    f32 = jnp.float32
    return {
        "tok_emb":  jax.random.normal(ks[0], (vocab, d_tok), f32) * s,
        "w_text":   jax.random.normal(ks[1], (d_tok, text_dim), f32) * s,
        "b_text":   jnp.zeros((1, text_dim), f32),
        "w_img":    jax.random.normal(ks[2], (img_c, img_dim), f32) * s,
        "b_img":    jnp.zeros((1, img_dim), f32),
        "w_fuse_t": jax.random.normal(ks[3], (text_dim, fusion_out), f32) * s,
        "w_fuse_i": jax.random.normal(ks[4], (img_dim, fusion_out), f32) * s,
        "b_fuse":   jax.random.normal(ks[5], (1, fusion_out), f32) * s,
        "w_cls":    jax.random.normal(ks[6], (fusion_out, 1), f32) * s,
        "b_cls":    jax.random.normal(ks[7], (1, 1), f32) * s,
    }


def pack_weight_slab(p, *, vocab, d_tok, text_dim, img_c, img_dim, fusion_out):
    """Pack every weight/bias into ONE lane-dense (R, 128) bf16 slab.

    Layout (only the two matmul blocks are 8-row aligned; the small params are
    one contiguous gap-free block):
      r_tok   : _align8(vocab) rows : tok_emb @ w_text (f32 fold, then bf16),
                                      lanes [0:text_dim)
      r_wfuse : 128 rows            : [w_fuse_t ; w_fuse_i ; 0], lanes [0:fusion_out)
      r_btxt  : 1 row               : b_text, lanes [0:text_dim)
      r_wimg  : img_c rows          : w_img,  lanes [text_dim : text_dim+img_dim)
      r_bimg  : 1 row               : b_img,  same lanes
      r_bfuse : 1 row               : b_fuse, lanes [0:fusion_out)
      r_wcls  : 1 row               : w_cls^T, lanes [0:fusion_out)
      r_bcls  : 1 row               : b_cls (lane 0)
    Zero padding guarantees padded lanes stay exactly 0 through the whole
    pipeline, so lane-placement addition is mathematically identical to the
    PyTorch concat.
    """
    assert text_dim + img_dim <= PAD and vocab <= PAD and fusion_out <= PAD
    vocab_pad = _align8(vocab)
    r_tok = 0
    r_wfuse = _align8(r_tok + vocab_pad)
    r_btxt = r_wfuse + PAD           # contiguous small-params block (no gaps)
    r_wimg = r_btxt + 1
    r_bimg = r_wimg + img_c
    r_bfuse = r_bimg + 1
    r_wcls = r_bfuse + 1
    r_bcls = r_wcls + 1
    n_rows = _align8(r_bcls + 1)

    slab = jnp.zeros((n_rows, PAD), jnp.float32)
    # Fold embedding table @ text projection in f32 BEFORE the bf16 cast.
    tok_text = p["tok_emb"] @ p["w_text"]                        # (vocab, text_dim)
    slab = slab.at[r_tok:r_tok + vocab, :text_dim].set(tok_text)
    slab = slab.at[r_wfuse:r_wfuse + text_dim, :fusion_out].set(p["w_fuse_t"])
    slab = slab.at[r_wfuse + text_dim:r_wfuse + text_dim + img_dim,
                   :fusion_out].set(p["w_fuse_i"])
    off = text_dim                                               # image lane offset
    slab = slab.at[r_btxt, :text_dim].set(p["b_text"][0])
    slab = slab.at[r_wimg:r_wimg + img_c, off:off + img_dim].set(p["w_img"])
    slab = slab.at[r_bimg, off:off + img_dim].set(p["b_img"][0])
    slab = slab.at[r_bfuse, :fusion_out].set(p["b_fuse"][0])
    slab = slab.at[r_wcls, :fusion_out].set(p["w_cls"][:, 0])
    slab = slab.at[r_bcls, 0].set(p["b_cls"][0, 0])

    offs = dict(vocab=vocab, vocab_pad=vocab_pad, r_tok=r_tok, r_wfuse=r_wfuse,
                r_btxt=r_btxt, r_wimg=r_wimg, r_bimg=r_bimg, r_bfuse=r_bfuse,
                r_wcls=r_wcls, r_bcls=r_bcls)
    return slab.astype(jnp.bfloat16), offs


# --------------------------------------------------------------------------
# Kernel: entire forward pass for one batch tile (all operands VMEM-resident)
# --------------------------------------------------------------------------
def _fused_forward_kernel(scal_ref, img_ref, w_ref, out_ref, *,
                          tb, seq_len, img_c, hw, vocab, vocab_pad,
                          r_tok, r_wfuse, r_btxt, r_wimg, r_bimg,
                          r_bfuse, r_wcls, r_bcls):
    f32 = jnp.float32
    bf16 = jnp.bfloat16
    B = tb

    # Small (VPU-consumed) parameter rows: upcast to f32 once.
    b_text = w_ref[pl.ds(r_btxt, 1), :].astype(f32)               # (1, 128)
    w_img = w_ref[pl.ds(r_wimg, img_c), :].astype(f32)            # (img_c, 128)
    b_img = w_ref[pl.ds(r_bimg, 1), :].astype(f32)                # (1, 128)
    b_fuse = w_ref[pl.ds(r_bfuse, 1), :].astype(f32)              # (1, 128)
    w_cls = w_ref[pl.ds(r_wcls, 1), :].astype(f32)                # (1, 128)
    b_cls = w_ref[pl.ds(r_bcls, 1), :].astype(f32)[:, 0:1]        # (1, 1)

    # ---- Text branch: CLS-token (position 0) embedding gather expressed as a
    # (B, vocab_pad) one-hot MXU matmul against the pre-folded tok_emb@w_text
    # block (K = vocab_pad = 32, single MXU pass), + tanh.
    ids = jnp.clip(scal_ref[:, 0:1], 0, vocab - 1)                # clamp OOB ids
    lanes = jax.lax.broadcasted_iota(jnp.int32, (B, vocab_pad), 1)
    onehot = (lanes == ids).astype(bf16)                          # (B, vocab_pad)
    text_feat = jnp.tanh(
        jnp.dot(onehot, w_ref[pl.ds(r_tok, vocab_pad), :],
                preferred_element_type=f32)
        + b_text)                                                 # (B, 128)
    # padded lanes: tanh(0 + 0) == 0, so lanes >= text_dim stay 0.

    # ---- Image branch: global average pool over H*W (lane reduces) + linear
    # head as img_c broadcast FMAs (VPU).  Head weights are packed at lane
    # offset text_dim -> image features land in lanes disjoint from text.
    img = img_ref[...].astype(f32)                                # (B, C*HW)
    inv_hw = 1.0 / hw
    img_feat = jnp.broadcast_to(b_img, (B, PAD))                  # init from bias
    for c in range(img_c):                                        # static unroll
        mc = jnp.sum(img[:, c * hw:(c + 1) * hw], axis=-1,
                     keepdims=True) * inv_hw                      # (B, 1)
        img_feat = img_feat + mc * w_img[c:c + 1, :]

    # image_features = zeros; image_features[image_available] = encoder(valid)
    avail = scal_ref[:, seq_len:seq_len + 1] > 0                  # (B, 1)
    img_feat = jnp.where(avail, img_feat, 0.0)

    # ---- Fusion: text/image occupy disjoint lanes, so add == concat.  One
    # full-width (B,128)@(128,128) bf16 MXU matmul with f32 accumulation.
    combined = (text_feat + img_feat).astype(bf16)
    fused = (jnp.dot(combined, w_ref[pl.ds(r_wfuse, PAD), :],
                     preferred_element_type=f32)
             + b_fuse)
    h = jnp.maximum(fused, 0.0)       # ReLU; nn.Dropout(0.5) = identity (eval)

    # ---- Classifier (fusion_out -> 1): VPU multiply + lane reduce instead of
    # a 1-lane MXU matmul.
    logits = jnp.sum(h * w_cls, axis=-1, keepdims=True) + b_cls   # (B, 1)

    # Lane-dense store (unmasked vst); host takes column 0.
    out_ref[...] = jnp.broadcast_to(logits, (B, PAD))


# --------------------------------------------------------------------------
# Host wrapper (mirrors MultimodalFakeNewsModel.forward)
# --------------------------------------------------------------------------
def multimodal_forward(w_slab, offs, dims, input_ids, attention_mask, image,
                       image_available):
    # TODO(synk): pretrained AutoModel text encoder cannot be reproduced here;
    # stand-in = CLS-token embedding + tanh projection (attention_mask unused).
    # TODO(synk): pretrained ResNet50 image encoder stand-in = global average
    # pool over H,W (NCHW) + linear head, computed inside the kernel.
    # Equivalence is with respect to reference_forward below, not the real
    # pretrained encoders.
    del attention_mask
    B, S = input_ids.shape
    C, HW = dims["img_c"], dims["hw"]

    # One small int32 operand: cols [0:S) = input_ids (kernel reads col 0),
    # col S = image_available.
    scal = jnp.concatenate(
        [input_ids.astype(jnp.int32),
         image_available.astype(jnp.int32).reshape(B, 1)], axis=1)   # (B, S+1)

    # NCHW image flattened to (B, C*H*W), stored bf16 to halve the DMA;
    # average pool happens in-kernel in f32.
    img2d = image.reshape(B, C * HW).astype(jnp.bfloat16)

    # Batch grid: single grid point at small B; parallel tiles (2nd TensorCore
    # on v7x, double-buffered image tiles everywhere) at large B.
    TB = _align8(B) if B <= 128 else 128
    B_pad = ((B + TB - 1) // TB) * TB
    if B_pad != B:
        scal = jnp.pad(scal, ((0, B_pad - B), (0, 0)))
        img2d = jnp.pad(img2d, ((0, B_pad - B), (0, 0)))
    grid = (B_pad // TB,)

    R = w_slab.shape[0]
    kernel = functools.partial(
        _fused_forward_kernel, tb=TB, seq_len=S, img_c=C, hw=HW, **offs)

    flops = (2 * B_pad * offs["vocab_pad"] * PAD + 2 * B_pad * PAD * PAD
             + B_pad * C * HW + 16 * B_pad * PAD)
    bytes_accessed = (scal.size * 4 + img2d.size * 2 + w_slab.size * 2
                      + B_pad * PAD * 4)

    # TODO(synk): for a repeatedly-called serving loop the ~45 KiB weight-slab
    # DMA could be hidden with a cross-pallas_call prefetch (semaphore + VMEM
    # ref outputs); here we rely on batch amortization instead.
    out = pl.pallas_call(
        kernel,
        out_shape=jax.ShapeDtypeStruct((B_pad, PAD), jnp.float32),
        grid=grid,
        in_specs=[pl.BlockSpec((TB, S + 1), lambda i: (i, 0)),
                  pl.BlockSpec((TB, C * HW), lambda i: (i, 0)),
                  pl.BlockSpec((R, PAD), lambda i: (0, 0))],
        out_specs=pl.BlockSpec((TB, PAD), lambda i: (i, 0)),
        compiler_params=pltpu.CompilerParams(
            dimension_semantics=("parallel",)),
        cost_estimate=pl.CostEstimate(flops=flops,
                                      transcendentals=B_pad * PAD,
                                      bytes_accessed=bytes_accessed),
    )(scal, img2d, w_slab)
    return out[:B, 0]                                # == logits.squeeze(-1)


def reference_forward(params, input_ids, attention_mask, image, image_available):
    """Pure-JAX f32 reference of the same synthetic forward (sanity check)."""
    del attention_mask
    text_cls = params["tok_emb"][input_ids[:, 0]]
    text_features = jnp.tanh(text_cls @ params["w_text"] + params["b_text"])
    img_pool = jnp.mean(image, axis=(2, 3))
    img_feat = img_pool @ params["w_img"] + params["b_img"]
    avail = (image_available > 0).reshape(-1, 1)
    image_features = jnp.where(avail, img_feat, 0.0)
    fused = (text_features @ params["w_fuse_t"]
             + image_features @ params["w_fuse_i"] + params["b_fuse"])
    h = jnp.maximum(fused, 0.0)
    logits = h @ params["w_cls"] + params["b_cls"]
    return logits[:, 0]


if __name__ == "__main__":
    key = jax.random.PRNGKey(0)
    k_params, k_ids, k_img = jax.random.split(key, 3)

    B, S = 8, 8                       # batch, sequence length
    C, H, W = 4, 16, 16               # small NCHW image
    VOCAB, D_TOK, TEXT_DIM, IMG_DIM, FUSION_OUT = 32, 32, 32, 64, 32

    params = init_params(k_params, vocab=VOCAB, d_tok=D_TOK, text_dim=TEXT_DIM,
                         img_c=C, img_dim=IMG_DIM, fusion_out=FUSION_OUT)
    w_slab, offs = pack_weight_slab(params, vocab=VOCAB, d_tok=D_TOK,
                                    text_dim=TEXT_DIM, img_c=C,
                                    img_dim=IMG_DIM, fusion_out=FUSION_OUT)
    dims = {"img_c": C, "hw": H * W}

    input_ids = jax.random.randint(k_ids, (B, S), 0, VOCAB, dtype=jnp.int32)
    attention_mask = jnp.ones((B, S), dtype=jnp.int32)
    image = jax.random.normal(k_img, (B, C, H, W), dtype=jnp.float32)
    image_available = jnp.array([1, 0, 1, 1, 0, 1, 1, 0], dtype=jnp.int32)

    logits = multimodal_forward(w_slab, offs, dims, input_ids, attention_mask,
                                image, image_available)
    jax.block_until_ready(logits)
    assert logits.shape == (B,) and logits.dtype == jnp.float32

    ref = reference_forward(params, input_ids, attention_mask, image,
                            image_available)
    # Tolerance accounts for bf16 storage of weights / image / fused activation.
    assert jnp.allclose(logits, ref, atol=2e-3, rtol=2e-2), (logits, ref)
    print("KERNEL_OK")
</pallas_src>

<mosaic_0001>
module attributes {stable_mosaic.version = 11 : i64} {
  func.func @_fused_forward_kernel(%arg0: i32, %arg1: memref<8x9xi32, #tpu.memory_space<vmem>>, %arg2: memref<8x1024xbf16, #tpu.memory_space<vmem>>, %arg3: memref<176x128xbf16, #tpu.memory_space<vmem>>, %arg4: memref<8x128xf32, #tpu.memory_space<vmem>>) attributes {dimension_semantics = [#tpu.dimension_semantics<parallel>], iteration_bounds = array<i64: 1>, scalar_prefetch = 0 : i64, scratch_operands = 0 : i64, tpu.core_type = #tpu.core_type<tc>, window_params = [{transform_indices = @transform_0, window_bounds = array<i64: 8, 9>}, {transform_indices = @transform_1, window_bounds = array<i64: 8, 1024>}, {pipeline_mode = #tpu.pipeline_mode<synchronous>, transform_indices = @transform_2, window_bounds = array<i64: 176, 128>}, {transform_indices = @transform_3, window_bounds = array<i64: 8, 128>}]} {
    %c160 = arith.constant 160 : index
    %c0 = arith.constant 0 : index
    %0 = vector.load %arg3[%c160, %c0] : memref<176x128xbf16, #tpu.memory_space<vmem>>, vector<1x128xbf16>
    %1 = arith.extf %0 : vector<1x128xbf16> to vector<1x128xf32>
    %c161 = arith.constant 161 : index
    %c0_0 = arith.constant 0 : index
    %2 = vector.load %arg3[%c161, %c0_0] : memref<176x128xbf16, #tpu.memory_space<vmem>>, vector<4x128xbf16>
    %3 = arith.extf %2 : vector<4x128xbf16> to vector<4x128xf32>
    %c165 = arith.constant 165 : index
    %c0_1 = arith.constant 0 : index
    %4 = vector.load %arg3[%c165, %c0_1] : memref<176x128xbf16, #tpu.memory_space<vmem>>, vector<1x128xbf16>
    %5 = arith.extf %4 : vector<1x128xbf16> to vector<1x128xf32>
    %c166 = arith.constant 166 : index
    %c0_2 = arith.constant 0 : index
    %6 = vector.load %arg3[%c166, %c0_2] : memref<176x128xbf16, #tpu.memory_space<vmem>>, vector<1x128xbf16>
    %7 = arith.extf %6 : vector<1x128xbf16> to vector<1x128xf32>
    %c167 = arith.constant 167 : index
    %c0_3 = arith.constant 0 : index
    %8 = vector.load %arg3[%c167, %c0_3] : memref<176x128xbf16, #tpu.memory_space<vmem>>, vector<1x128xbf16>
    %9 = arith.extf %8 : vector<1x128xbf16> to vector<1x128xf32>
    %c168 = arith.constant 168 : index
    %c0_4 = arith.constant 0 : index
    %10 = vector.load %arg3[%c168, %c0_4] : memref<176x128xbf16, #tpu.memory_space<vmem>>, vector<1x128xbf16>
    %11 = arith.extf %10 : vector<1x128xbf16> to vector<1x128xf32>
    %12 = vector.extract_strided_slice %11 {offsets = [0, 0], sizes = [1, 1], strides = [1, 1]} : vector<1x128xf32> to vector<1x1xf32>
    %c0_5 = arith.constant 0 : index
    %c0_6 = arith.constant 0 : index
    %13 = vector.load %arg1[%c0_5, %c0_6] : memref<8x9xi32, #tpu.memory_space<vmem>>, vector<8x1xi32>
    %c0_i32 = arith.constant 0 : i32
    %c31_i32 = arith.constant 31 : i32
    %14 = vector.broadcast %c0_i32 : i32 to vector<8x1xi32>
    %15 = arith.maxsi %14, %13 : vector<8x1xi32>
    %16 = vector.broadcast %c31_i32 : i32 to vector<8x1xi32>
    %17 = arith.minsi %16, %15 : vector<8x1xi32>
    %18 = tpu.iota {dimensions = array<i32: 1>} : vector<8x32xi32>
    %19 = vector.broadcast %17 : vector<8x1xi32> to vector<8x32xi32>
    %20 = arith.cmpi eq, %18, %19 : vector<8x32xi32>
    %21 = arith.extui %20 : vector<8x32xi1> to vector<8x32xi32>
    %22 = arith.sitofp %21 : vector<8x32xi32> to vector<8x32xf32>
    %23 = arith.truncf %22 : vector<8x32xf32> to vector<8x32xbf16>
    %c0_7 = arith.constant 0 : index
    %c0_8 = arith.constant 0 : index
    %24 = vector.load %arg3[%c0_7, %c0_8] : memref<176x128xbf16, #tpu.memory_space<vmem>>, vector<32x128xbf16>
    %cst = arith.constant dense<0.000000e+00> : vector<8x128xf32>
    %25 = tpu.matmul %23, %24, %cst {dimension_numbers = #tpu.dot_dimension_numbers<[1], [0], [0], [1], [0, 0, 1, 1], [], []>} : vector<8x32xbf16>, vector<32x128xbf16>, vector<8x128xf32> -> vector<8x128xf32>
    %26 = vector.broadcast %1 : vector<1x128xf32> to vector<8x128xf32>
    %27 = arith.addf %25, %26 : vector<8x128xf32>
    %28 = math.tanh %27 : vector<8x128xf32>
    %c0_9 = arith.constant 0 : index
    %c0_10 = arith.constant 0 : index
    %29 = vector.load %arg2[%c0_9, %c0_10] : memref<8x1024xbf16, #tpu.memory_space<vmem>>, vector<8x1024xbf16>
    %30 = arith.extf %29 : vector<8x1024xbf16> to vector<8x1024xf32>
    %31 = vector.shape_cast %5 : vector<1x128xf32> to vector<1x128xf32>
    %32 = vector.broadcast %31 : vector<1x128xf32> to vector<8x128xf32>
    %33 = vector.extract_strided_slice %30 {offsets = [0, 0], sizes = [8, 256], strides = [1, 1]} : vector<8x1024xf32> to vector<8x256xf32>
    %cst_11 = arith.constant dense<0.000000e+00> : vector<8xf32>
    %34 = vector.multi_reduction <add>, %33, %cst_11 [1] : vector<8x256xf32> to vector<8xf32>
    %35 = vector.shape_cast %34 : vector<8xf32> to vector<8x1xf32>
    %cst_12 = arith.constant 3.906250e-03 : f32
    %36 = vector.broadcast %cst_12 : f32 to vector<8x1xf32>
    %37 = arith.mulf %35, %36 : vector<8x1xf32>
    %38 = vector.extract_strided_slice %3 {offsets = [0, 0], sizes = [1, 128], strides = [1, 1]} : vector<4x128xf32> to vector<1x128xf32>
    %39 = vector.broadcast %37 : vector<8x1xf32> to vector<8x128xf32>
    %40 = vector.broadcast %38 : vector<1x128xf32> to vector<8x128xf32>
    %41 = arith.mulf %39, %40 : vector<8x128xf32>
    %42 = arith.addf %32, %41 : vector<8x128xf32>
    %43 = vector.extract_strided_slice %30 {offsets = [0, 256], sizes = [8, 256], strides = [1, 1]} : vector<8x1024xf32> to vector<8x256xf32>
    %cst_13 = arith.constant dense<0.000000e+00> : vector<8xf32>
    %44 = vector.multi_reduction <add>, %43, %cst_13 [1] : vector<8x256xf32> to vector<8xf32>
    %45 = vector.shape_cast %44 : vector<8xf32> to vector<8x1xf32>
    %cst_14 = arith.constant 3.906250e-03 : f32
    %46 = vector.broadcast %cst_14 : f32 to vector<8x1xf32>
    %47 = arith.mulf %45, %46 : vector<8x1xf32>
    %48 = vector.extract_strided_slice %3 {offsets = [1, 0], sizes = [1, 128], strides = [1, 1]} : vector<4x128xf32> to vector<1x128xf32>
    %49 = vector.broadcast %47 : vector<8x1xf32> to vector<8x128xf32>
    %50 = vector.broadcast %48 : vector<1x128xf32> to vector<8x128xf32>
    %51 = arith.mulf %49, %50 : vector<8x128xf32>
    %52 = arith.addf %42, %51 : vector<8x128xf32>
    %53 = vector.extract_strided_slice %30 {offsets = [0, 512], sizes = [8, 256], strides = [1, 1]} : vector<8x1024xf32> to vector<8x256xf32>
    %cst_15 = arith.constant dense<0.000000e+00> : vector<8xf32>
    %54 = vector.multi_reduction <add>, %53, %cst_15 [1] : vector<8x256xf32> to vector<8xf32>
    %55 = vector.shape_cast %54 : vector<8xf32> to vector<8x1xf32>
    %cst_16 = arith.constant 3.906250e-03 : f32
    %56 = vector.broadcast %cst_16 : f32 to vector<8x1xf32>
    %57 = arith.mulf %55, %56 : vector<8x1xf32>
    %58 = vector.extract_strided_slice %3 {offsets = [2, 0], sizes = [1, 128], strides = [1, 1]} : vector<4x128xf32> to vector<1x128xf32>
    %59 = vector.broadcast %57 : vector<8x1xf32> to vector<8x128xf32>
    %60 = vector.broadcast %58 : vector<1x128xf32> to vector<8x128xf32>
    %61 = arith.mulf %59, %60 : vector<8x128xf32>
    %62 = arith.addf %52, %61 : vector<8x128xf32>
    %63 = vector.extract_strided_slice %30 {offsets = [0, 768], sizes = [8, 256], strides = [1, 1]} : vector<8x1024xf32> to vector<8x256xf32>
    %cst_17 = arith.constant dense<0.000000e+00> : vector<8xf32>
    %64 = vector.multi_reduction <add>, %63, %cst_17 [1] : vector<8x256xf32> to vector<8xf32>
    %65 = vector.shape_cast %64 : vector<8xf32> to vector<8x1xf32>
    %cst_18 = arith.constant 3.906250e-03 : f32
    %66 = vector.broadcast %cst_18 : f32 to vector<8x1xf32>
    %67 = arith.mulf %65, %66 : vector<8x1xf32>
    %68 = vector.extract_strided_slice %3 {offsets = [3, 0], sizes = [1, 128], strides = [1, 1]} : vector<4x128xf32> to vector<1x128xf32>
    %69 = vector.broadcast %67 : vector<8x1xf32> to vector<8x128xf32>
    %70 = vector.broadcast %68 : vector<1x128xf32> to vector<8x128xf32>
    %71 = arith.mulf %69, %70 : vector<8x128xf32>
    %72 = arith.addf %62, %71 : vector<8x128xf32>
    %c0_19 = arith.constant 0 : index
    %c8 = arith.constant 8 : index
    %73 = vector.load %arg1[%c0_19, %c8] : memref<8x9xi32, #tpu.memory_space<vmem>>, vector<8x1xi32>
    %c0_i32_20 = arith.constant 0 : i32
    %74 = vector.broadcast %c0_i32_20 : i32 to vector<8x1xi32>
    %75 = arith.cmpi sgt, %73, %74 : vector<8x1xi32>
    %cst_21 = arith.constant 0.000000e+00 : f32
    %76 = vector.shape_cast %75 : vector<8x1xi1> to vector<8x1xi1>
    %77 = vector.broadcast %76 : vector<8x1xi1> to vector<8x128xi1>
    %78 = vector.broadcast %cst_21 : f32 to vector<8x128xf32>
    %79 = arith.select %77, %72, %78 : vector<8x128xi1>, vector<8x128xf32>
    %80 = arith.addf %28, %79 : vector<8x128xf32>
    %81 = arith.truncf %80 : vector<8x128xf32> to vector<8x128xbf16>
    %c32 = arith.constant 32 : index
    %c0_22 = arith.constant 0 : index
    %82 = vector.load %arg3[%c32, %c0_22] : memref<176x128xbf16, #tpu.memory_space<vmem>>, vector<128x128xbf16>
    %cst_23 = arith.constant dense<0.000000e+00> : vector<8x128xf32>
    %83 = tpu.matmul %81, %82, %cst_23 {dimension_numbers = #tpu.dot_dimension_numbers<[1], [0], [0], [1], [0, 0, 1, 1], [], []>} : vector<8x128xbf16>, vector<128x128xbf16>, vector<8x128xf32> -> vector<8x128xf32>
    %84 = vector.broadcast %7 : vector<1x128xf32> to vector<8x128xf32>
    %85 = arith.addf %83, %84 : vector<8x128xf32>
    %cst_24 = arith.constant 0.000000e+00 : f32
    %86 = vector.broadcast %cst_24 : f32 to vector<8x128xf32>
    %87 = arith.maximumf %85, %86 : vector<8x128xf32>
    %88 = vector.broadcast %9 : vector<1x128xf32> to vector<8x128xf32>
    %89 = arith.mulf %87, %88 : vector<8x128xf32>
    %cst_25 = arith.constant dense<0.000000e+00> : vector<8xf32>
    %90 = vector.multi_reduction <add>, %89, %cst_25 [1] : vector<8x128xf32> to vector<8xf32>
    %91 = vector.shape_cast %90 : vector<8xf32> to vector<8x1xf32>
    %92 = vector.broadcast %12 : vector<1x1xf32> to vector<8x1xf32>
    %93 = arith.addf %91, %92 : vector<8x1xf32>
    %94 = vector.shape_cast %93 : vector<8x1xf32> to vector<8x1xf32>
    %95 = vector.broadcast %94 : vector<8x1xf32> to vector<8x128xf32>
    %c0_26 = arith.constant 0 : index
    %c0_27 = arith.constant 0 : index
    %96 = vector.load %arg4[%c0_26, %c0_27] : memref<8x128xf32, #tpu.memory_space<vmem>>, vector<8x128xf32>
    tpu.vector_store %arg4[%c0_26, %c0_27], %95 {strides = array<i32>} : memref<8x128xf32, #tpu.memory_space<vmem>>, vector<8x128xf32>,
    return
  }
  func.func @transform_0(%arg0: i32) -> (i32, i32) {
    %c0_i32 = arith.constant 0 : i32
    %c0_i32_0 = arith.constant 0 : i32
    return %arg0, %c0_i32 : i32, i32
  }
  func.func @transform_1(%arg0: i32) -> (i32, i32) {
    %c0_i32 = arith.constant 0 : i32
    %c0_i32_0 = arith.constant 0 : i32
    return %arg0, %c0_i32 : i32, i32
  }
  func.func @transform_2(%arg0: i32) -> (i32, i32) {
    %c0_i32 = arith.constant 0 : i32
    %c0_i32_0 = arith.constant 0 : i32
    %c0_i32_1 = arith.constant 0 : i32
    return %c0_i32, %c0_i32_0 : i32, i32
  }
  func.func @transform_3(%arg0: i32) -> (i32, i32) {
    %c0_i32 = arith.constant 0 : i32
    %c0_i32_0 = arith.constant 0 : i32
    return %arg0, %c0_i32 : i32, i32
  }
}

</mosaic_0001>

<llo_original>
// kernel: tpu_custom_call.1
$region0: #{tpu_custom_call.1}
  #allocation0 [shape = 'u32[]', space=smem, size = 0x4, offset = 0x4, fixed_abs, tag = 'smem constant byte address 0x4 - core index']
  #allocation1 [shape = 'u32[144,128]{1,0:T(1,128)}', space=vmem, size = 0x12000, scoped, tag = 'internal scratch']
  %s0 = inlined_call_operand.hbm [shape: s32[8,9], index: 0, kind: input, shape index: {}]
  %s1 = inlined_call_operand.hbm [shape: bf16[8,1024], index: 1, kind: input, shape index: {}]
  %s2 = inlined_call_operand.hbm [shape: bf16[176,128], index: 2, kind: input, shape index: {}]
  %s3 = inlined_call_operand.hbm [shape: f32[8,128], index: 3, kind: output, shape index: {}]
  %s4 = sld [smem:[#allocation0]]
  $region34: #{tpu_custom_call.1} parent=0
    _
  %s6 = ssub.s32 1, %s4
  %s7 = scalar_select 0, %s6, %s4
  $region1: #{tpu_custom_call.1} parent=0
    #allocation2 [shape = 'u8[4096]{0}', space=vmem, size = 0x1000, scoped, tag = 'input window, operand 0, single buffered']
    #allocation3 [shape = 's32[1]{0}', space=sflag, size = 0x4, scoped, tag = 'scoped memory for tpu_custom_call.1']
    #allocation4 [shape = 's32[1]{0}', space=sflag, size = 0x4, scoped, tag = 'scoped memory for tpu_custom_call.1']
    #allocation5 [shape = 'u8[16384]{0}', space=vmem, size = 0x4000, scoped, tag = 'input window, operand 1, single buffered']
    #allocation6 [shape = 's32[1]{0}', space=sflag, size = 0x4, scoped, tag = 'scoped memory for tpu_custom_call.1']
    #allocation7 [shape = 'u8[45056]{0}', space=vmem, size = 0xb000, scoped, tag = 'input window, operand 2, single buffered']
    #allocation8 [shape = 'u8[4096]{0}', space=vmem, size = 0x1000, scoped, tag = 'output window, operand 0, single buffered']
    %8 = vsyncpa [#allocation3], 0
    %9 = vsyncpa [#allocation6], 0
    %10 = vsyncpa [#allocation4], 0
    // Predicated region
    $region2: #{tpu_custom_call.1} parent=1 // pred_check
      _
    $region3: #{tpu_custom_call.1} parent=1 // pred_check_branch
      %12 = sbr.rel (0) target = $region5
    $region4: #{tpu_custom_call.1} parent=1 // pred_region
      %s14 = ssub.s32 128, 128
      %15 = vsyncadd [#allocation3], %s14
      %s17 = sshll.u32 [#allocation2], 4
      %s18 = int_to_ptr.vmem [resolvable:$true] %s17
      %20 = dma.hbm_to_vmem [thread:$0]  %s0, 128, %s18, [#allocation3]
    $region5: #{tpu_custom_call.1} parent=1 // pred_fallthru
      _
    // Predicated region
    $region6: #{tpu_custom_call.1} parent=1 // pred_check
      _
    $region7: #{tpu_custom_call.1} parent=1 // pred_check_branch
      %22 = sbr.rel (0) target = $region9
    $region8: #{tpu_custom_call.1} parent=1 // pred_region
      %s24 = ssub.s32 512, 512
      %25 = vsyncadd [#allocation6], %s24
      %s27 = sshll.u32 [#allocation5], 4
      %s28 = int_to_ptr.vmem [resolvable:$true] %s27
      %30 = dma.hbm_to_vmem [thread:$0]  %s1, 512, %s28, [#allocation6]
    $region9: #{tpu_custom_call.1} parent=1 // pred_fallthru
      _
    // Predicated region
    $region10: #{tpu_custom_call.1} parent=1 // pred_check
      _
    $region11: #{tpu_custom_call.1} parent=1 // pred_check_branch
      %32 = sbr.rel (0) target = $region13
    $region12: #{tpu_custom_call.1} parent=1 // pred_region
      %s34 = ssub.s32 1408, 1408
      %35 = vsyncadd [#allocation6], %s34
      %s36 = sshll.u32 [#allocation7], 4
      %s37 = int_to_ptr.vmem [resolvable:$true] %s36
      %42 = dma.hbm_to_vmem [thread:$0]  %s2, 1408, %s37, [#allocation6], 64, 64, 4
    $region13: #{tpu_custom_call.1} parent=1 // pred_fallthru
      _
    // Predicated region
    $region14: #{tpu_custom_call.1} parent=1 // pred_check
      _
    $region15: #{tpu_custom_call.1} parent=1 // pred_check_branch
      %44 = sbr.rel (0) target = $region17
    $region16: #{tpu_custom_call.1} parent=1 // pred_region
      %45 = dma.done [#allocation3], 128
    $region17: #{tpu_custom_call.1} parent=1 // pred_fallthru
      _
    // Predicated region
    $region18: #{tpu_custom_call.1} parent=1 // pred_check
      _
    $region19: #{tpu_custom_call.1} parent=1 // pred_check_branch
      %47 = sbr.rel (0) target = $region21
    $region20: #{tpu_custom_call.1} parent=1 // pred_region
      %48 = dma.done [#allocation6], 512
    $region21: #{tpu_custom_call.1} parent=1 // pred_fallthru
      _
    // Predicated region
    $region22: #{tpu_custom_call.1} parent=1 // pred_check
      _
    $region23: #{tpu_custom_call.1} parent=1 // pred_check_branch
      %50 = sbr.rel (0) target = $region25
    $region24: #{tpu_custom_call.1} parent=1 // pred_region
      %51 = dma.done [#allocation6], 1408
    $region25: #{tpu_custom_call.1} parent=1 // pred_fallthru
      _
    %v53 = vld [vmem:[#allocation7 + $0x50] sm:$0x1]
    %v54 = vunpack.c.l.bf16 %v53
    %v55 = vld [vmem:[#allocation7 + $0x50] sm:$0x7]
    %v56 = vunpack.c.l.bf16 %v55
    %v57 = vld [vmem:[#allocation7 + $0x50] sm:$0x4]
    %v58 = vunpack.c.l.bf16 %v57
    %v59 = vld [vmem:[#allocation7 + $0x50] sm:$0x8]
    %v60 = vunpack.c.l.bf16 %v59
    %v61 = vld [vmem:[#allocation7 + $0x54] sm:$0x1]
    %v62 = vunpack.c.l.bf16 %v61
    %v63 = vld [vmem:[#allocation2] sm:$0xff]
    %vm64 = vcmp.gt.s32.totalorder %v63, 0
    %v65 = vsel %vm64, %v63, 0
    %vm66 = vcmp.lt.s32.totalorder %v65, 31
    %v67 = vsel %vm66, %v65, 31
    %v68 = vlaneseq
    %v69 = vand.u32 %v68, 127
    %70 = vset.pattern.permute.xlu0 0
    %71 = vperm.xlu0 %70, %v67
    %v72 = vpop.permute.xlu0 %71
    %vm73 = vcmp.eq.s32.totalorder %v69, %v72
    %v74 = vsel %vm73, 1, 0
    %v75 = vcvt.s32.f32 %v74
    %v76 = vpack.c.bf16 %v75, %v75
    %v77 = vld [vmem:[#allocation7] sm:$0xf]
    %v78 = vld [vmem:[#allocation7 + $0x4] sm:$0xf]
    %v79 = vld [vmem:[#allocation7 + $0x8] sm:$0xf]
    %v80 = vld [vmem:[#allocation7 + $0xc] sm:$0xf]
    %v81 = vlaneseq
    %v82 = vshrl.u32 %v81, 7
    %v83 = vsub.s32 0, %v82
    %v84 = vrot.slane %v54, %v83
    %v89 = vunpack.c.l.b16 %v77
    %v90 = vunpack.c.l.b16 %v78
    %v91 = vunpack.c.l.b16 %v79
    %v92 = vunpack.c.l.b16 %v80
    %v93 = vpack.c.b16 %v90, %v89
    %v94 = vpack.c.b16 %v92, %v91
    %vm97 = vcmask 261120
    %v99 = vsel %vm97, %v76, 0
    %101 = vmatprep.subr.bf16.mxu0 0
    %102 = vmatpush1.bf16.msra.mxu0 %v93
    %103 = vmatprep.subr.bf16.mxu0 0
    %104 = vmatpush1.bf16.msra.mxu0 %v94
    %105 = vmatprep.subr.bf16.mxu0 0
    %106 = vmatpush1.bf16.msra.mxu0 0
    %107 = vmatprep.subr.bf16.mxu0 0
    %108 = vmatpush1.bf16.msra.mxu0 0
    %109 = vmatprep.subr.bf16.mxu0 0
    %110 = vmatpush1.bf16.msra.mxu0 0
    %111 = vmatprep.subr.bf16.mxu0 0
    %112 = vmatpush1.bf16.msra.mxu0 0
    %113 = vmatprep.subr.bf16.mxu0 0
    %114 = vmatpush1.bf16.msra.mxu0 0
    %115 = vmatprep.subr.bf16.mxu0 0
    %116 = vmatpush1.bf16.msra.mxu0 0
    %117 = vmatprep.subr.bf16.mxu0 0
    %118 = vmatpush1.bf16.msra.mxu0 0
    %119 = vmatprep.subr.bf16.mxu0 0
    %120 = vmatpush1.bf16.msra.mxu0 0
    %121 = vmatprep.subr.bf16.mxu0 0
    %122 = vmatpush1.bf16.msra.mxu0 0
    %123 = vmatprep.subr.bf16.mxu0 0
    %124 = vmatpush1.bf16.msra.mxu0 0
    %125 = vmatprep.subr.bf16.mxu0 0
    %126 = vmatpush1.bf16.msra.mxu0 0
    %127 = vmatprep.subr.bf16.mxu0 0
    %128 = vmatpush1.bf16.msra.mxu0 0
    %129 = vmatprep.subr.bf16.mxu0 0
    %130 = vmatpush1.bf16.msra.mxu0 0
    %131 = vmatprep.subr.bf16.mxu0 0
    %132 = vmatpush1.bf16.msra.mxu0 0
    %133 = vmatprep.mubr.bf16.mxu0 0
    %134 = vmatmul.mubr.bf16.gmra.mrb[0].mxu0 %v99
    %v135 = vpop.f32.mrb[0].mxu0
    %v136 = vadd.f32 %v84, %v135
    %v137 = vpop.f32.mrb[0].mxu0
    %v138 = vpop.f32.mrb[0].mxu0
    %v139 = vpop.f32.mrb[0].mxu0
    %140 = vdwg.mxu0
    %v141 = vtanh.pop %v136
    %v142 = vld [vmem:[#allocation5] sm:$0xff]
    %v143 = vld [vmem:[#allocation5 + $0x8] sm:$0xff]
    %v144 = vld [vmem:[#allocation5 + $0x10] sm:$0xff]
    %v145 = vld [vmem:[#allocation5 + $0x18] sm:$0xff]
    %v146 = vunpack.c.l.bf16 %v142
    %v147 = vunpack.c.h.bf16 %v142
    %v148 = vunpack.c.l.bf16 %v143
    %v149 = vunpack.c.h.bf16 %v143
    %v150 = vunpack.c.l.bf16 %v144
    %v151 = vunpack.c.h.bf16 %v144
    %v152 = vunpack.c.l.bf16 %v145
    %v153 = vunpack.c.h.bf16 %v145
    %v154 = vlaneseq
    %v155 = vshrl.u32 %v154, 7
    %v156 = vsub.s32 5, %v155
    %v157 = vrot.slane %v58, %v156
    %v158 = vadd.f32 %v146, %v147
    %159 = vadd.xlane.f32.xlu0 %v158
    %v160 = vpop.xlane.xlu0 %159
    %v161 = vmul.f32 %v160, 0.00390625
    %v162 = vlaneseq
    %v163 = vshrl.u32 %v162, 7
    %v164 = vsub.s32 1, %v163
    %v165 = vrot.slane %v56, %v164
    %v166 = vmul.f32 %v161, %v165
    %v167 = vadd.f32 %v157, %v166
    %v168 = vadd.f32 %v148, %v149
    %169 = vadd.xlane.f32.xlu0 %v168
    %v170 = vpop.xlane.xlu0 %169
    %v171 = vmul.f32 %v170, 0.00390625
    %v172 = vlaneseq
    %v173 = vshrl.u32 %v172, 7
    %v174 = vsub.s32 2, %v173
    %v175 = vrot.slane %v56, %v174
    %v176 = vmul.f32 %v171, %v175
    %v177 = vadd.f32 %v167, %v176
    %v178 = vadd.f32 %v150, %v151
    %179 = vadd.xlane.f32.xlu0 %v178
    %v180 = vpop.xlane.xlu0 %179
    %v181 = vmul.f32 %v180, 0.00390625
    %v182 = vlaneseq
    %v183 = vshrl.u32 %v182, 7
    %v184 = vsub.s32 3, %v183
    %v185 = vrot.slane %v56, %v184
    %v186 = vmul.f32 %v181, %v185
    %v187 = vadd.f32 %v177, %v186
    %v188 = vadd.f32 %v152, %v153
    %189 = vadd.xlane.f32.xlu0 %v188
    %v190 = vpop.xlane.xlu0 %189
    %v191 = vmul.f32 %v190, 0.00390625
    %v192 = vlaneseq
    %v193 = vshrl.u32 %v192, 7
    %v194 = vsub.s32 4, %v193
    %v195 = vrot.slane %v56, %v194
    %v196 = vmul.f32 %v191, %v195
    %v197 = vadd.f32 %v187, %v196
    %vm198 = vcmp.gt.s32.totalorder %v63, 0
    %v199 = vsel %vm198, 1, 0
    %200 = vset.pattern.permute.xlu0 8
    %201 = vperm.xlu0 %200, %v199
    %v202 = vpop.permute.xlu0 %201
    %vm203 = vcmp.eq.s32.totalorder %v202, 1
    %v204 = vsel %vm203, %v197, 0.0
    %v205 = vadd.f32 %v141, %v204
    %v206 = vpack.c.bf16 %v205, %v205
    %v207 = vld [vmem:[#allocation7 + $0x10] sm:$0xf]
    %v208 = vld [vmem:[#allocation7 + $0x14] sm:$0xf]
    %v209 = vld [vmem:[#allocation7 + $0x18] sm:$0xf]
    %v210 = vld [vmem:[#allocation7 + $0x1c] sm:$0xf]
    %v211 = vld [vmem:[#allocation7 + $0x20] sm:$0xf]
    %v212 = vld [vmem:[#allocation7 + $0x24] sm:$0xf]
    %v213 = vld [vmem:[#allocation7 + $0x28] sm:$0xf]
    %v214 = vld [vmem:[#allocation7 + $0x2c] sm:$0xf]
    %v215 = vld [vmem:[#allocation7 + $0x30] sm:$0xf]
    %v216 = vld [vmem:[#allocation7 + $0x34] sm:$0xf]
    %v217 = vld [vmem:[#allocation7 + $0x38] sm:$0xf]
    %v218 = vld [vmem:[#allocation7 + $0x3c] sm:$0xf]
    %v219 = vld [vmem:[#allocation7 + $0x40] sm:$0xf]
    %v220 = vld [vmem:[#allocation7 + $0x44] sm:$0xf]
    %v221 = vld [vmem:[#allocation7 + $0x48] sm:$0xf]
    %v222 = vld [vmem:[#allocation7 + $0x4c] sm:$0xf]
    %v223 = vlaneseq
    %v224 = vshrl.u32 %v223, 7
    %v225 = vsub.s32 6, %v224
    %v226 = vrot.slane %v60, %v225
    %v243 = vunpack.c.l.b16 %v207
    %v244 = vunpack.c.l.b16 %v208
    %v245 = vunpack.c.l.b16 %v209
    %v246 = vunpack.c.l.b16 %v210
    %v247 = vunpack.c.l.b16 %v211
    %v248 = vunpack.c.l.b16 %v212
    %v249 = vunpack.c.l.b16 %v213
    %v250 = vunpack.c.l.b16 %v214
    %v251 = vunpack.c.l.b16 %v215
    %v252 = vunpack.c.l.b16 %v216
    %v253 = vunpack.c.l.b16 %v217
    %v254 = vunpack.c.l.b16 %v218
    %v255 = vunpack.c.l.b16 %v219
    %v256 = vunpack.c.l.b16 %v220
    %v257 = vunpack.c.l.b16 %v221
    %v258 = vunpack.c.l.b16 %v222
    %v259 = vpack.c.b16 %v244, %v243
    %v260 = vpack.c.b16 %v246, %v245
    %v261 = vpack.c.b16 %v248, %v247
    %v262 = vpack.c.b16 %v250, %v249
    %v263 = vpack.c.b16 %v252, %v251
    %v264 = vpack.c.b16 %v254, %v253
    %v265 = vpack.c.b16 %v256, %v255
    %v266 = vpack.c.b16 %v258, %v257
    %275 = vmatprep.subr.bf16.mxu0 0
    %276 = vmatpush1.bf16.msra.mxu0 %v259
    %277 = vmatprep.subr.bf16.mxu0 0
    %278 = vmatpush1.bf16.msra.mxu0 %v260
    %279 = vmatprep.subr.bf16.mxu0 0
    %280 = vmatpush1.bf16.msra.mxu0 %v261
    %281 = vmatprep.subr.bf16.mxu0 0
    %282 = vmatpush1.bf16.msra.mxu0 %v262
    %283 = vmatprep.subr.bf16.mxu0 0
    %284 = vmatpush1.bf16.msra.mxu0 %v263
    %285 = vmatprep.subr.bf16.mxu0 0
    %286 = vmatpush1.bf16.msra.mxu0 %v264
    %287 = vmatprep.subr.bf16.mxu0 0
    %288 = vmatpush1.bf16.msra.mxu0 %v265
    %289 = vmatprep.subr.bf16.mxu0 0
    %290 = vmatpush1.bf16.msra.mxu0 %v266
    %291 = vmatprep.subr.bf16.mxu0 0
    %292 = vmatpush1.bf16.msra.mxu0 0
    %293 = vmatprep.subr.bf16.mxu0 0
    %294 = vmatpush1.bf16.msra.mxu0 0
    %295 = vmatprep.subr.bf16.mxu0 0
    %296 = vmatpush1.bf16.msra.mxu0 0
    %297 = vmatprep.subr.bf16.mxu0 0
    %298 = vmatpush1.bf16.msra.mxu0 0
    %299 = vmatprep.subr.bf16.mxu0 0
    %300 = vmatpush1.bf16.msra.mxu0 0
    %301 = vmatprep.subr.bf16.mxu0 0
    %302 = vmatpush1.bf16.msra.mxu0 0
    %303 = vmatprep.subr.bf16.mxu0 0
    %304 = vmatpush1.bf16.msra.mxu0 0
    %305 = vmatprep.subr.bf16.mxu0 0
    %306 = vmatpush1.bf16.msra.mxu0 0
    %307 = vmatprep.mubr.bf16.mxu0 0
    %308 = vmatmul.mubr.bf16.gmra.mrb[0].mxu0 %v206
    %v309 = vpop.f32.mrb[0].mxu0
    %v310 = vadd.f32 %v226, %v309
    %v311 = vpop.f32.mrb[0].mxu0
    %v312 = vpop.f32.mrb[0].mxu0
    %v313 = vpop.f32.mrb[0].mxu0
    %314 = vdwg.mxu0
    %v315 = vmax.f32 %v310, 0.0
    %v316 = vlaneseq
    %v317 = vshrl.u32 %v316, 7
    %v318 = vsub.s32 7, %v317
    %v319 = vrot.slane %v60, %v318
    %v320 = vmul.f32 %v315, %v319
    %321 = vadd.xlane.f32.xlu0 %v320
    %v322 = vpop.xlane.xlu0 %321
    %v323 = vlaneseq
    %v324 = vshrl.u32 %v323, 7
    %v325 = vsub.s32 0, %v324
    %v326 = vrot.slane %v62, %v325
    %v327 = vadd.f32 %v322, %v326
    %329 = vset.pattern.permute.xlu0 0
    %330 = vperm.xlu0 %329, %v327
    %v331 = vpop.permute.xlu0 %330
    %333 = vst [vmem:[#allocation8] sm:$0xff] %v331
    // Predicated region
    $region26: #{tpu_custom_call.1} parent=1 // pred_check
      _
    $region27: #{tpu_custom_call.1} parent=1 // pred_check_branch
      %335 = sbr.rel (0) target = $region29
    $region28: #{tpu_custom_call.1} parent=1 // pred_region
      %s337 = ssub.s32 128, 128
      %338 = vsyncadd [#allocation4], %s337
      %s340 = sshll.u32 [#allocation8], 4
      %s341 = int_to_ptr.vmem [resolvable:$true] %s340
      %343 = dma.vmem_to_hbm [thread:$0]  %s341, 128, %s3, [#allocation4]
    $region29: #{tpu_custom_call.1} parent=1 // pred_fallthru
      _
    // Predicated region
    $region30: #{tpu_custom_call.1} parent=1 // pred_check
      _
    $region31: #{tpu_custom_call.1} parent=1 // pred_check_branch
      %345 = sbr.rel (0) target = $region33
    $region32: #{tpu_custom_call.1} parent=1 // pred_region
      %346 = dma.done [#allocation4], 128
    $region33: #{tpu_custom_call.1} parent=1 // pred_fallthru
      _
    %347 = vsyncpa [#allocation3], 1
    %348 = vsyncpa [#allocation6], 1
    %349 = vsyncpa [#allocation4], 1

</llo_original>
